<compile_context>
chip_gen: v7x
topology: tpu7x:2x2x1
jax: 0.10.0
libtpu: 0.0.40
codegen_flags: <defaults>
</compile_context>

<pallas_src>
import functools

import jax
import jax.numpy as jnp
from jax.experimental import pallas as pl
from jax.experimental.pallas import tpu as pltpu


def _round_up(x, m):
    return ((x + m - 1) // m) * m


def _cdiv(a, b):
    return -(-a // b)


def _spec(shape, index_map, buffers=None):
    """BlockSpec with optional explicit buffer count (falls back to default)."""
    if buffers is None:
        return pl.BlockSpec(shape, index_map)
    try:
        return pl.BlockSpec(shape, index_map, pipeline_mode=pl.Buffered(buffers))
    except TypeError:  # older jax without pipeline_mode: default double-buffering
        return pl.BlockSpec(shape, index_map)


def ffn_kernel(x_ref, w1_ref, b1_ref, w2_ref, p_ref, o_ref, acc_ref, *,
               inv_d, n_pad):
    k = pl.program_id(1)
    nk = pl.num_programs(1)
    cdt = w1_ref.dtype  # compute dtype (bf16 production, f32 strict)

    @pl.when(k == 0)
    def _():
        acc_ref[...] = jnp.zeros_like(acc_ref)

    # Hidden-chunk of the FFN: relu(x @ W1[:, chunk] + b1[chunk]) @ W2[chunk, :].
    # MXU matmuls with f32 accumulation.
    h = jnp.dot(x_ref[...].astype(cdt), w1_ref[...],
                preferred_element_type=jnp.float32)          # (tm, tn)
    h = jnp.maximum(h + b1_ref[...], 0.0)
    acc_ref[...] += jnp.dot(h.astype(cdt), w2_ref[...],
                            preferred_element_type=jnp.float32)  # (tm, d_in_p)

    # TODO(synk): Dropout is identity in eval mode; training-mode RNG masking not implemented.

    @pl.when(k == nk - 1)
    def _():
        b2 = p_ref[0:1, :]
        gamma = p_ref[1:2, :]
        beta = p_ref[2:3, :]
        y = acc_ref[...] + b2 + x_ref[...].astype(jnp.float32)
        # Padded feature lanes of y are exactly zero, so the mean over the true
        # d_in is sum(y) / d_in. Two-pass variance with an exact correction for
        # the (0 - mean) contribution of the n_pad padded lanes.
        mean = jnp.sum(y, axis=-1, keepdims=True) * inv_d
        yc = y - mean
        var = (jnp.sum(yc * yc, axis=-1, keepdims=True)
               - n_pad * mean * mean) * inv_d
        yn = yc * jax.lax.rsqrt(var + 1e-5)
        o_ref[...] = (yn * gamma + beta).astype(o_ref.dtype)


def _vmem_budget(tm, tn, d_in_p, nk, w_isz, out_isz):
    nbuf_w = 1 if nk == 1 else 2
    io = 2 * tm * d_in_p * 4 + 2 * tm * d_in_p * out_isz       # x in + out (double-buffered)
    wts = nbuf_w * (2 * d_in_p * tn * w_isz + tn * 4)          # W1 + W2 chunks + b1 chunk
    acc = tm * d_in_p * 4                                      # f32 accumulator scratch
    h = tm * tn * 4                                            # f32 hidden intermediate
    small = 3 * d_in_p * 4                                     # [b2; gamma; beta]
    return io + wts + acc + h + small


def _choose_tiles(n_rows, d_in_p, d_hid_128, tile_rows, tile_hidden,
                  w_isz, out_isz, usable):
    rows_p = _round_up(max(n_rows, 8), 8)
    tm = min(_round_up(tile_rows, 8), rows_p)
    tn_max = d_hid_128 if tile_hidden is None else min(
        _round_up(tile_hidden, 128), d_hid_128)
    tn = min(tn_max, 2048)
    while True:
        nk = _cdiv(d_hid_128, tn)
        if _vmem_budget(tm, tn, d_in_p, nk, w_isz, out_isz) <= usable:
            return tm, tn
        if tn > 512 or (tn > 128 and tm <= 64):
            tn = max(128, _round_up(tn // 2, 128))
        elif tm > 8:
            tm = max(8, _round_up(tm // 2, 8))
        elif tn > 128:
            tn = max(128, _round_up(tn // 2, 128))
        else:
            return tm, tn  # smallest tiling; let the compiler have it


def positionwise_ffn(x, w1, b1, w2, b2, gamma, beta, *,
                     compute_dtype=jnp.bfloat16, tile_rows=512,
                     tile_hidden=None, out_dtype=None):
    """Fused FFN + residual + LayerNorm.

    x: (B, L, d_in). w1: (d_in, d_hid), w2: (d_hid, d_in) — Conv1d(k=1) weights
    laid out so the kernel computes x @ W (== the PyTorch pointwise conv).
    compute_dtype=bfloat16 is the production path (bf16 MXU inputs, f32
    accumulation + LN); float32 is strict-precision/test only. out_dtype
    defaults to x.dtype (pass bfloat16 to halve output writeback).
    """
    B, L, d_in = x.shape
    d_hid = w1.shape[1]
    n_rows = B * L
    out_dtype = x.dtype if out_dtype is None else out_dtype

    d_in_p = _round_up(d_in, 128)
    d_hid_128 = _round_up(d_hid, 128)
    w_isz = jnp.dtype(compute_dtype).itemsize
    out_isz = jnp.dtype(out_dtype).itemsize

    # Generation-aware VMEM budget (v7x: 64 MiB/TC, v5e/v6e: 128 MiB).
    try:
        vmem_cap = int(pltpu.get_tpu_info().vmem_capacity_bytes)
    except Exception:
        vmem_cap = 64 << 20  # conservative fallback
    usable = int(0.75 * vmem_cap)

    tm, tn = _choose_tiles(n_rows, d_in_p, d_hid_128, tile_rows, tile_hidden,
                           w_isz, out_isz, usable)
    d_hid_p = _round_up(d_hid_128, tn)    # hidden padded to a multiple of tn (exact: zeros)
    nk = d_hid_p // tn
    rows_p = _round_up(max(n_rows, 8), 8)  # only pad rows to sublane multiple
    grid_m = _cdiv(rows_p, tm)             # partial last row-tile handled by Pallas masking

    # Activations: avoid an extra HBM pad copy in the common aligned case.
    x2d = x.reshape(n_rows, d_in).astype(jnp.float32)
    if rows_p != n_rows or d_in_p != d_in:
        x2d = jnp.pad(x2d, ((0, rows_p - n_rows), (0, d_in_p - d_in)))

    if d_in_p == d_in and d_hid_p == d_hid:
        w1p = w1.astype(compute_dtype)
        w2p = w2.astype(compute_dtype)
    else:
        w1p = jnp.pad(w1, ((0, d_in_p - d_in), (0, d_hid_p - d_hid))).astype(compute_dtype)
        w2p = jnp.pad(w2, ((0, d_hid_p - d_hid), (0, d_in_p - d_in))).astype(compute_dtype)
    b1p = jnp.pad(b1, (0, d_hid_p - d_hid)).reshape(1, d_hid_p).astype(jnp.float32)
    # Pack (b2, gamma, beta) into one small operand -> one (single-buffered) DMA.
    params = jnp.stack([
        jnp.pad(b2, (0, d_in_p - d_in)),
        jnp.pad(gamma, (0, d_in_p - d_in)),
        jnp.pad(beta, (0, d_in_p - d_in)),
    ]).astype(jnp.float32)

    budget = _vmem_budget(tm, tn, d_in_p, nk, w_isz, out_isz)
    vmem_limit = int(min(max(budget + (8 << 20), 32 << 20), int(0.85 * vmem_cap)))

    cost = pl.CostEstimate(
        flops=int(4 * n_rows * d_in * d_hid),
        transcendentals=int(n_rows),
        bytes_accessed=int(n_rows * d_in * 4 + n_rows * d_in * out_isz
                           + 2 * d_in_p * d_hid_p * w_isz
                           + (d_hid_p + 3 * d_in_p) * 4),
    )

    kernel = functools.partial(ffn_kernel, inv_d=1.0 / d_in,
                               n_pad=float(d_in_p - d_in))

    # Weight chunks: single-buffer when the whole hidden dim fits in one chunk
    # (grid-invariant); otherwise default double-buffering to overlap DMA.
    wbuf = 1 if nk == 1 else None
    in_specs = [
        pl.BlockSpec((tm, d_in_p), lambda i, k: (i, 0)),        # x rows (resident across k)
        _spec((d_in_p, tn), lambda i, k: (0, k), wbuf),         # W1 hidden-chunk
        _spec((1, tn), lambda i, k: (0, k), wbuf),              # b1 hidden-chunk
        _spec((tn, d_in_p), lambda i, k: (k, 0), wbuf),         # W2 hidden-chunk
        _spec((3, d_in_p), lambda i, k: (0, 0), 1),             # [b2; gamma; beta]
    ]

    out2d = pl.pallas_call(
        kernel,
        out_shape=jax.ShapeDtypeStruct((rows_p, d_in_p), out_dtype),
        grid_spec=pltpu.PrefetchScalarGridSpec(
            num_scalar_prefetch=0,
            grid=(grid_m, nk),
            in_specs=in_specs,
            out_specs=pl.BlockSpec((tm, d_in_p), lambda i, k: (i, 0)),
            scratch_shapes=[pltpu.VMEM((tm, d_in_p), jnp.float32)],
        ),
        compiler_params=pltpu.CompilerParams(
            dimension_semantics=("parallel", "arbitrary"),
            vmem_limit_bytes=vmem_limit),
        cost_estimate=cost,
    )(x2d, w1p, b1p, w2p, params)

    if rows_p != n_rows or d_in_p != d_in:
        out2d = out2d[:n_rows, :d_in]
    return out2d.reshape(B, L, d_in)


def reference_ffn(x, w1, b1, w2, b2, gamma, beta):
    h = jnp.maximum(jnp.einsum("bld,dh->blh", x, w1) + b1, 0.0)
    y = jnp.einsum("blh,hd->bld", h, w2) + b2 + x
    mean = jnp.mean(y, axis=-1, keepdims=True)
    var = jnp.mean((y - mean) ** 2, axis=-1, keepdims=True)
    y = (y - mean) / jnp.sqrt(var + 1e-5)
    return y * gamma + beta


if __name__ == "__main__":
    key = jax.random.PRNGKey(0)
    kx, k1, kb1, k2, kb2, kx2, k3, kb3, k4, kb4 = jax.random.split(key, 10)

    # --- Test 1: small canonical shapes -----------------------------------
    B, L, d_in, d_hid = 2, 8, 32, 64
    x = jax.random.normal(kx, (B, L, d_in), dtype=jnp.float32)
    # Conv1d(k=1) weight (out, in, 1) is stored here as (in, out) so the kernel
    # computes x @ W, which equals the PyTorch pointwise conv.
    w1 = jax.random.normal(k1, (d_in, d_hid), dtype=jnp.float32) * 0.1
    b1 = jax.random.normal(kb1, (d_hid,), dtype=jnp.float32) * 0.1
    w2 = jax.random.normal(k2, (d_hid, d_in), dtype=jnp.float32) * 0.1
    b2 = jax.random.normal(kb2, (d_in,), dtype=jnp.float32) * 0.1
    gamma = jnp.ones((d_in,), dtype=jnp.float32)
    beta = jnp.zeros((d_in,), dtype=jnp.float32)

    ref = reference_ffn(x, w1, b1, w2, b2, gamma, beta)

    # Strict-precision path (f32 weights on the MXU) -> tight tolerance.
    out_f32 = jax.block_until_ready(
        positionwise_ffn(x, w1, b1, w2, b2, gamma, beta,
                         compute_dtype=jnp.float32))
    assert out_f32.shape == (B, L, d_in)
    assert jnp.allclose(out_f32, ref, atol=1e-4, rtol=1e-4)

    # Production path (bf16 MXU inputs, f32 accumulate + LN).
    out_bf16 = jax.block_until_ready(
        positionwise_ffn(x, w1, b1, w2, b2, gamma, beta,
                         compute_dtype=jnp.bfloat16))
    assert out_bf16.shape == (B, L, d_in)
    assert jnp.allclose(out_bf16, ref, atol=5e-2, rtol=5e-2)

    # --- Test 2: exercise hidden-chunk reduction axis + partial row tile ---
    B2, L2, d_in2, d_hid2 = 2, 5, 64, 256
    x2 = jax.random.normal(kx2, (B2, L2, d_in2), dtype=jnp.float32)
    w1b = jax.random.normal(k3, (d_in2, d_hid2), dtype=jnp.float32) * 0.1
    b1b = jax.random.normal(kb3, (d_hid2,), dtype=jnp.float32) * 0.1
    w2b = jax.random.normal(k4, (d_hid2, d_in2), dtype=jnp.float32) * 0.1
    b2b = jax.random.normal(kb4, (d_in2,), dtype=jnp.float32) * 0.1
    gamma2 = jnp.ones((d_in2,), dtype=jnp.float32)
    beta2 = jnp.zeros((d_in2,), dtype=jnp.float32)

    ref2 = reference_ffn(x2, w1b, b1b, w2b, b2b, gamma2, beta2)
    out2 = jax.block_until_ready(
        positionwise_ffn(x2, w1b, b1b, w2b, b2b, gamma2, beta2,
                         compute_dtype=jnp.float32,
                         tile_rows=8, tile_hidden=128))   # grid = (2 rows, 2 hid chunks)
    assert out2.shape == (B2, L2, d_in2)
    assert jnp.allclose(out2, ref2, atol=1e-4, rtol=1e-4)

    print("KERNEL_OK")
</pallas_src>

<mosaic_0001>
module attributes {stable_mosaic.version = 11 : i64} {
  func.func @ffn_kernel(%arg0: i32, %arg1: i32, %arg2: memref<16x128xf32, #tpu.memory_space<vmem>>, %arg3: memref<128x128xf32, #tpu.memory_space<vmem>>, %arg4: memref<1x128xf32, #tpu.memory_space<vmem>>, %arg5: memref<128x128xf32, #tpu.memory_space<vmem>>, %arg6: memref<3x128xf32, #tpu.memory_space<vmem>>, %arg7: memref<16x128xf32, #tpu.memory_space<vmem>>, %arg8: memref<16x128xf32, #tpu.memory_space<vmem>>) attributes {dimension_semantics = [#tpu.dimension_semantics<parallel>, #tpu.dimension_semantics<arbitrary>], iteration_bounds = array<i64: 1, 1>, scalar_prefetch = 0 : i64, scratch_operands = 1 : i64, tpu.core_type = #tpu.core_type<tc>, window_params = [{transform_indices = @transform_0, window_bounds = array<i64: 16, 128>}, {pipeline_mode = #tpu.pipeline_mode<synchronous>, transform_indices = @transform_1, window_bounds = array<i64: 128, 128>}, {pipeline_mode = #tpu.pipeline_mode<synchronous>, transform_indices = @transform_2, window_bounds = array<i64: 1, 128>}, {pipeline_mode = #tpu.pipeline_mode<synchronous>, transform_indices = @transform_3, window_bounds = array<i64: 128, 128>}, {pipeline_mode = #tpu.pipeline_mode<synchronous>, transform_indices = @transform_4, window_bounds = array<i64: 3, 128>}, {transform_indices = @transform_5, window_bounds = array<i64: 16, 128>}]} {
    %c0_i32 = arith.constant 0 : i32
    %0 = arith.cmpi eq, %arg1, %c0_i32 : i32
    %1 = arith.extui %0 : i1 to i32
    %c0_i32_0 = arith.constant 0 : i32
    %2 = arith.cmpi ne, %1, %c0_i32_0 : i32
    scf.if %2 {
      %cst_16 = arith.constant 0.000000e+00 : f32
      %19 = vector.broadcast %cst_16 : f32 to vector<16x128xf32>
      %c0_17 = arith.constant 0 : index
      %c0_18 = arith.constant 0 : index
      %20 = vector.load %arg8[%c0_17, %c0_18] : memref<16x128xf32, #tpu.memory_space<vmem>>, vector<16x128xf32>
      tpu.vector_store %arg8[%c0_17, %c0_18], %19 {strides = array<i32>} : memref<16x128xf32, #tpu.memory_space<vmem>>, vector<16x128xf32>,
    } else {
    }
    %c0 = arith.constant 0 : index
    %c0_1 = arith.constant 0 : index
    %3 = vector.load %arg2[%c0, %c0_1] : memref<16x128xf32, #tpu.memory_space<vmem>>, vector<16x128xf32>
    %c0_2 = arith.constant 0 : index
    %c0_3 = arith.constant 0 : index
    %4 = vector.load %arg3[%c0_2, %c0_3] : memref<128x128xf32, #tpu.memory_space<vmem>>, vector<128x128xf32>
    %cst = arith.constant dense<0.000000e+00> : vector<16x128xf32>
    %5 = tpu.matmul %3, %4, %cst {dimension_numbers = #tpu.dot_dimension_numbers<[1], [0], [0], [1], [0, 0, 1, 1], [], []>} : vector<16x128xf32>, vector<128x128xf32>, vector<16x128xf32> -> vector<16x128xf32>
    %c0_4 = arith.constant 0 : index
    %c0_5 = arith.constant 0 : index
    %6 = vector.load %arg4[%c0_4, %c0_5] : memref<1x128xf32, #tpu.memory_space<vmem>>, vector<1x128xf32>
    %7 = vector.broadcast %6 : vector<1x128xf32> to vector<16x128xf32>
    %8 = arith.addf %5, %7 : vector<16x128xf32>
    %cst_6 = arith.constant 0.000000e+00 : f32
    %9 = vector.broadcast %cst_6 : f32 to vector<16x128xf32>
    %10 = arith.maximumf %8, %9 : vector<16x128xf32>
    %c0_7 = arith.constant 0 : index
    %c0_8 = arith.constant 0 : index
    %11 = vector.load %arg8[%c0_7, %c0_8] : memref<16x128xf32, #tpu.memory_space<vmem>>, vector<16x128xf32>
    %c0_9 = arith.constant 0 : index
    %c0_10 = arith.constant 0 : index
    %12 = vector.load %arg5[%c0_9, %c0_10] : memref<128x128xf32, #tpu.memory_space<vmem>>, vector<128x128xf32>
    %cst_11 = arith.constant dense<0.000000e+00> : vector<16x128xf32>
    %13 = tpu.matmul %10, %12, %cst_11 {dimension_numbers = #tpu.dot_dimension_numbers<[1], [0], [0], [1], [0, 0, 1, 1], [], []>} : vector<16x128xf32>, vector<128x128xf32>, vector<16x128xf32> -> vector<16x128xf32>
    %14 = arith.addf %11, %13 : vector<16x128xf32>
    %c0_12 = arith.constant 0 : index
    %c0_13 = arith.constant 0 : index
    %15 = vector.load %arg8[%c0_12, %c0_13] : memref<16x128xf32, #tpu.memory_space<vmem>>, vector<16x128xf32>
    tpu.vector_store %arg8[%c0_12, %c0_13], %14 {strides = array<i32>} : memref<16x128xf32, #tpu.memory_space<vmem>>, vector<16x128xf32>,
    %c0_i32_14 = arith.constant 0 : i32
    %16 = arith.cmpi eq, %arg1, %c0_i32_14 : i32
    %17 = arith.extui %16 : i1 to i32
    %c0_i32_15 = arith.constant 0 : i32
    %18 = arith.cmpi ne, %17, %c0_i32_15 : i32
    scf.if %18 {
      %c0_16 = arith.constant 0 : index
      %c0_17 = arith.constant 0 : index
      %19 = vector.load %arg6[%c0_16, %c0_17] : memref<3x128xf32, #tpu.memory_space<vmem>>, vector<1x128xf32>
      %c1 = arith.constant 1 : index
      %c0_18 = arith.constant 0 : index
      %20 = vector.load %arg6[%c1, %c0_18] : memref<3x128xf32, #tpu.memory_space<vmem>>, vector<1x128xf32>
      %c2 = arith.constant 2 : index
      %c0_19 = arith.constant 0 : index
      %21 = vector.load %arg6[%c2, %c0_19] : memref<3x128xf32, #tpu.memory_space<vmem>>, vector<1x128xf32>
      %c0_20 = arith.constant 0 : index
      %c0_21 = arith.constant 0 : index
      %22 = vector.load %arg8[%c0_20, %c0_21] : memref<16x128xf32, #tpu.memory_space<vmem>>, vector<16x128xf32>
      %23 = vector.broadcast %19 : vector<1x128xf32> to vector<16x128xf32>
      %24 = arith.addf %22, %23 : vector<16x128xf32>
      %c0_22 = arith.constant 0 : index
      %c0_23 = arith.constant 0 : index
      %25 = vector.load %arg2[%c0_22, %c0_23] : memref<16x128xf32, #tpu.memory_space<vmem>>, vector<16x128xf32>
      %26 = arith.addf %24, %25 : vector<16x128xf32>
      %cst_24 = arith.constant dense<0.000000e+00> : vector<16xf32>
      %27 = vector.multi_reduction <add>, %26, %cst_24 [1] : vector<16x128xf32> to vector<16xf32>
      %28 = vector.shape_cast %27 : vector<16xf32> to vector<16x1xf32>
      %cst_25 = arith.constant 3.125000e-02 : f32
      %29 = vector.broadcast %cst_25 : f32 to vector<16x1xf32>
      %30 = arith.mulf %28, %29 : vector<16x1xf32>
      %31 = vector.broadcast %30 : vector<16x1xf32> to vector<16x128xf32>
      %32 = arith.subf %26, %31 : vector<16x128xf32>
      %33 = arith.mulf %32, %32 : vector<16x128xf32>
      %cst_26 = arith.constant dense<0.000000e+00> : vector<16xf32>
      %34 = vector.multi_reduction <add>, %33, %cst_26 [1] : vector<16x128xf32> to vector<16xf32>
      %35 = vector.shape_cast %34 : vector<16xf32> to vector<16x1xf32>
      %cst_27 = arith.constant 9.600000e+01 : f32
      %36 = vector.broadcast %cst_27 : f32 to vector<16x1xf32>
      %37 = arith.mulf %36, %30 : vector<16x1xf32>
      %38 = arith.mulf %37, %30 : vector<16x1xf32>
      %39 = arith.subf %35, %38 : vector<16x1xf32>
      %cst_28 = arith.constant 3.125000e-02 : f32
      %40 = vector.broadcast %cst_28 : f32 to vector<16x1xf32>
      %41 = arith.mulf %39, %40 : vector<16x1xf32>
      %cst_29 = arith.constant 9.99999974E-6 : f32
      %42 = vector.broadcast %cst_29 : f32 to vector<16x1xf32>
      %43 = arith.addf %41, %42 : vector<16x1xf32>
      %44 = math.rsqrt %43 : vector<16x1xf32>
      %45 = vector.broadcast %44 : vector<16x1xf32> to vector<16x128xf32>
      %46 = arith.mulf %32, %45 : vector<16x128xf32>
      %47 = vector.broadcast %20 : vector<1x128xf32> to vector<16x128xf32>
      %48 = arith.mulf %46, %47 : vector<16x128xf32>
      %49 = vector.broadcast %21 : vector<1x128xf32> to vector<16x128xf32>
      %50 = arith.addf %48, %49 : vector<16x128xf32>
      %c0_30 = arith.constant 0 : index
      %c0_31 = arith.constant 0 : index
      %51 = vector.load %arg7[%c0_30, %c0_31] : memref<16x128xf32, #tpu.memory_space<vmem>>, vector<16x128xf32>
      tpu.vector_store %arg7[%c0_30, %c0_31], %50 {strides = array<i32>} : memref<16x128xf32, #tpu.memory_space<vmem>>, vector<16x128xf32>,
    } else {
    }
    return
  }
  func.func @transform_0(%arg0: i32, %arg1: i32) -> (i32, i32) {
    %c0_i32 = arith.constant 0 : i32
    %c0_i32_0 = arith.constant 0 : i32
    return %arg0, %c0_i32 : i32, i32
  }
  func.func @transform_1(%arg0: i32, %arg1: i32) -> (i32, i32) {
    %c0_i32 = arith.constant 0 : i32
    %c0_i32_0 = arith.constant 0 : i32
    return %c0_i32, %arg1 : i32, i32
  }
  func.func @transform_2(%arg0: i32, %arg1: i32) -> (i32, i32) {
    %c0_i32 = arith.constant 0 : i32
    %c0_i32_0 = arith.constant 0 : i32
    return %c0_i32, %arg1 : i32, i32
  }
  func.func @transform_3(%arg0: i32, %arg1: i32) -> (i32, i32) {
    %c0_i32 = arith.constant 0 : i32
    %c0_i32_0 = arith.constant 0 : i32
    return %arg1, %c0_i32 : i32, i32
  }
  func.func @transform_4(%arg0: i32, %arg1: i32) -> (i32, i32) {
    %c0_i32 = arith.constant 0 : i32
    %c0_i32_0 = arith.constant 0 : i32
    %c0_i32_1 = arith.constant 0 : i32
    return %c0_i32, %c0_i32_0 : i32, i32
  }
  func.func @transform_5(%arg0: i32, %arg1: i32) -> (i32, i32) {
    %c0_i32 = arith.constant 0 : i32
    %c0_i32_0 = arith.constant 0 : i32
    return %arg0, %c0_i32 : i32, i32
  }
}

</mosaic_0001>

<llo_original>
// kernel: tpu_custom_call.1
$region0: #{tpu_custom_call.1}
  #allocation0 [shape = 'u32[]', space=smem, size = 0x4, offset = 0x4, fixed_abs, tag = 'smem constant byte address 0x4 - core index']
  #allocation1 [shape = 'u32[144,128]{1,0:T(1,128)}', space=vmem, size = 0x12000, scoped, tag = 'internal scratch']
  #allocation2 [shape = 'f32[16,128]{1,0:T(8,128)}', space=vmem, size = 0x2000, scoped, tag = 'scratch operand']
  %s0 = inlined_call_operand.hbm [shape: f32[16,128], index: 0, kind: input, shape index: {}]
  %s1 = inlined_call_operand.hbm [shape: f32[128,128], index: 1, kind: input, shape index: {}]
  %s2 = inlined_call_operand.vmem [shape: f32[1,128], index: 2, kind: input, shape index: {}]
  %s3 = inlined_call_operand.hbm [shape: f32[128,128], index: 3, kind: input, shape index: {}]
  %s4 = inlined_call_operand.vmem [shape: f32[3,128], index: 4, kind: input, shape index: {}]
  %s5 = inlined_call_operand.hbm [shape: f32[16,128], index: 5, kind: output, shape index: {}]
  %s6 = sld [smem:[#allocation0]]
  $region50: #{tpu_custom_call.1} parent=0
    _
  %s8 = ssub.s32 1, %s6
  %s9 = scalar_select 0, %s8, %s6
  $region1: #{tpu_custom_call.1} parent=0
    #allocation3 [shape = 'u8[8192]{0}', space=vmem, size = 0x2000, scoped, tag = 'input window, operand 0, single buffered']
    #allocation4 [shape = 's32[1]{0}', space=sflag, size = 0x4, scoped, tag = 'scoped memory for tpu_custom_call.1']
    #allocation5 [shape = 's32[1]{0}', space=sflag, size = 0x4, scoped, tag = 'scoped memory for tpu_custom_call.1']
    #allocation6 [shape = 'u8[65536]{0}', space=vmem, size = 0x10000, scoped, tag = 'input window, operand 1, single buffered']
    #allocation7 [shape = 's32[1]{0}', space=sflag, size = 0x4, scoped, tag = 'scoped memory for tpu_custom_call.1']
    #allocation8 [shape = 'u8[65536]{0}', space=vmem, size = 0x10000, scoped, tag = 'input window, operand 3, single buffered']
    #allocation9 [shape = 'u8[8192]{0}', space=vmem, size = 0x2000, scoped, tag = 'output window, operand 0, single buffered']
    %10 = vsyncpa [#allocation4], 0
    %11 = vsyncpa [#allocation7], 0
    %12 = vsyncpa [#allocation5], 0
    // Predicated region
    $region2: #{tpu_custom_call.1} parent=1 // pred_check
      _
    $region3: #{tpu_custom_call.1} parent=1 // pred_check_branch
      %14 = sbr.rel (0) target = $region5
    $region4: #{tpu_custom_call.1} parent=1 // pred_region
      %s16 = ssub.s32 256, 256
      %17 = vsyncadd [#allocation4], %s16
      %s18 = sshll.u32 [#allocation3], 4
      %s19 = int_to_ptr.vmem [resolvable:$true] %s18
      %24 = dma.hbm_to_vmem [thread:$0]  %s0, 256, %s19, [#allocation4], 128, 128, 8
    $region5: #{tpu_custom_call.1} parent=1 // pred_fallthru
      _
    // Predicated region
    $region6: #{tpu_custom_call.1} parent=1 // pred_check
      _
    $region7: #{tpu_custom_call.1} parent=1 // pred_check_branch
      %26 = sbr.rel (0) target = $region9
    $region8: #{tpu_custom_call.1} parent=1 // pred_region
      %s28 = ssub.s32 2048, 2048
      %29 = vsyncadd [#allocation7], %s28
      %s30 = sshll.u32 [#allocation6], 4
      %s31 = int_to_ptr.vmem [resolvable:$true] %s30
      %36 = dma.hbm_to_vmem [thread:$0]  %s1, 2048, %s31, [#allocation7], 128, 128, 8
    $region9: #{tpu_custom_call.1} parent=1 // pred_fallthru
      _
    // Predicated region
    $region10: #{tpu_custom_call.1} parent=1 // pred_check
      _
    $region11: #{tpu_custom_call.1} parent=1 // pred_check_branch
      %38 = sbr.rel (0) target = $region13
    $region12: #{tpu_custom_call.1} parent=1 // pred_region
      _
    $region13: #{tpu_custom_call.1} parent=1 // pred_fallthru
      _
    // Predicated region
    $region14: #{tpu_custom_call.1} parent=1 // pred_check
      _
    $region15: #{tpu_custom_call.1} parent=1 // pred_check_branch
      %40 = sbr.rel (0) target = $region17
    $region16: #{tpu_custom_call.1} parent=1 // pred_region
      %s42 = ssub.s32 2048, 2048
      %43 = vsyncadd [#allocation7], %s42
      %s44 = sshll.u32 [#allocation8], 4
      %s45 = int_to_ptr.vmem [resolvable:$true] %s44
      %50 = dma.hbm_to_vmem [thread:$0]  %s3, 2048, %s45, [#allocation7], 128, 128, 8
    $region17: #{tpu_custom_call.1} parent=1 // pred_fallthru
      _
    // Predicated region
    $region18: #{tpu_custom_call.1} parent=1 // pred_check
      _
    $region19: #{tpu_custom_call.1} parent=1 // pred_check_branch
      %52 = sbr.rel (0) target = $region21
    $region20: #{tpu_custom_call.1} parent=1 // pred_region
      _
    $region21: #{tpu_custom_call.1} parent=1 // pred_fallthru
      _
    // Predicated region
    $region22: #{tpu_custom_call.1} parent=1 // pred_check
      _
    $region23: #{tpu_custom_call.1} parent=1 // pred_check_branch
      %54 = sbr.rel (0) target = $region25
    $region24: #{tpu_custom_call.1} parent=1 // pred_region
      %55 = dma.done [#allocation4], 256
    $region25: #{tpu_custom_call.1} parent=1 // pred_fallthru
      _
    // Predicated region
    $region26: #{tpu_custom_call.1} parent=1 // pred_check
      _
    $region27: #{tpu_custom_call.1} parent=1 // pred_check_branch
      %57 = sbr.rel (0) target = $region29
    $region28: #{tpu_custom_call.1} parent=1 // pred_region
      %58 = dma.done [#allocation7], 2048
    $region29: #{tpu_custom_call.1} parent=1 // pred_fallthru
      _
    // Predicated region
    $region30: #{tpu_custom_call.1} parent=1 // pred_check
      _
    $region31: #{tpu_custom_call.1} parent=1 // pred_check_branch
      %60 = sbr.rel (0) target = $region33
    $region32: #{tpu_custom_call.1} parent=1 // pred_region
      %61 = dma.done [#allocation7], 2048
    $region33: #{tpu_custom_call.1} parent=1 // pred_fallthru
      _
    %p62 = scmp.eq.s32.totalorder 0, 0
    // Predicated region
    $region34: #{tpu_custom_call.1} parent=1 // pred_check
      %p63 = pneg %p62
    $region35: #{tpu_custom_call.1} parent=1 // pred_check_branch
      %65 = sbr.rel (%p63) target = $region37
    $region36: #{tpu_custom_call.1} parent=1 // pred_region
      %66 = vst [vmem:[#allocation2] sm:$0xff] 0.0
      %67 = vst [vmem:[#allocation2 + $0x8] sm:$0xff] 0.0
    $region37: #{tpu_custom_call.1} parent=1 // pred_fallthru
      _
    %v68 = vld [vmem:[#allocation3] sm:$0xff]
    %v69 = vld [vmem:[#allocation3 + $0x8] sm:$0xff]
    %v70 = vld [vmem:[#allocation6] sm:$0xff]
    %v71 = vld [vmem:[#allocation6 + $0x8] sm:$0xff]
    %v72 = vld [vmem:[#allocation6 + $0x10] sm:$0xff]
    %v73 = vld [vmem:[#allocation6 + $0x18] sm:$0xff]
    %v74 = vld [vmem:[#allocation6 + $0x20] sm:$0xff]
    %v75 = vld [vmem:[#allocation6 + $0x28] sm:$0xff]
    %v76 = vld [vmem:[#allocation6 + $0x30] sm:$0xff]
    %v77 = vld [vmem:[#allocation6 + $0x38] sm:$0xff]
    %v78 = vld [vmem:[#allocation6 + $0x40] sm:$0xff]
    %v79 = vld [vmem:[#allocation6 + $0x48] sm:$0xff]
    %v80 = vld [vmem:[#allocation6 + $0x50] sm:$0xff]
    %v81 = vld [vmem:[#allocation6 + $0x58] sm:$0xff]
    %v82 = vld [vmem:[#allocation6 + $0x60] sm:$0xff]
    %v83 = vld [vmem:[#allocation6 + $0x68] sm:$0xff]
    %v84 = vld [vmem:[#allocation6 + $0x70] sm:$0xff]
    %v85 = vld [vmem:[#allocation6 + $0x78] sm:$0xff]
    %v86 = vld [vmem:[%s2] sm:$0x1]
    %v88 = vlaneseq
    %v89 = vshrl.u32 %v88, 7
    %v90 = vsub.s32 0, %v89
    %v91 = vrot.slane %v86, %v90
    %93 = vmatprep.subr.mxu0 0.0
    %94 = vmatpush1.msra.mxu0 %v70
    %95 = vmatprep.subr.mxu0 0.0
    %96 = vmatpush1.msra.mxu0 %v71
    %97 = vmatprep.subr.mxu0 0.0
    %98 = vmatpush1.msra.mxu0 %v72
    %99 = vmatprep.subr.mxu0 0.0
    %100 = vmatpush1.msra.mxu0 %v73
    %101 = vmatprep.subr.mxu0 0.0
    %102 = vmatpush1.msra.mxu0 %v74
    %103 = vmatprep.subr.mxu0 0.0
    %104 = vmatpush1.msra.mxu0 %v75
    %105 = vmatprep.subr.mxu0 0.0
    %106 = vmatpush1.msra.mxu0 %v76
    %107 = vmatprep.subr.mxu0 0.0
    %108 = vmatpush1.msra.mxu0 %v77
    %109 = vmatprep.subr.mxu0 0.0
    %110 = vmatpush1.msra.mxu0 %v78
    %111 = vmatprep.subr.mxu0 0.0
    %112 = vmatpush1.msra.mxu0 %v79
    %113 = vmatprep.subr.mxu0 0.0
    %114 = vmatpush1.msra.mxu0 %v80
    %115 = vmatprep.subr.mxu0 0.0
    %116 = vmatpush1.msra.mxu0 %v81
    %117 = vmatprep.subr.mxu0 0.0
    %118 = vmatpush1.msra.mxu0 %v82
    %119 = vmatprep.subr.mxu0 0.0
    %120 = vmatpush1.msra.mxu0 %v83
    %121 = vmatprep.subr.mxu0 0.0
    %122 = vmatpush1.msra.mxu0 %v84
    %123 = vmatprep.subr.mxu0 0.0
    %124 = vmatpush1.msra.mxu0 %v85
    %125 = vmatprep.subr.mxu0 0.0
    %126 = vmatpush1.msra.mxu0 0.0
    %127 = vmatprep.subr.mxu0 0.0
    %128 = vmatpush1.msra.mxu0 0.0
    %129 = vmatprep.subr.mxu0 0.0
    %130 = vmatpush1.msra.mxu0 0.0
    %131 = vmatprep.subr.mxu0 0.0
    %132 = vmatpush1.msra.mxu0 0.0
    %133 = vmatprep.subr.mxu0 0.0
    %134 = vmatpush1.msra.mxu0 0.0
    %135 = vmatprep.subr.mxu0 0.0
    %136 = vmatpush1.msra.mxu0 0.0
    %137 = vmatprep.subr.mxu0 0.0
    %138 = vmatpush1.msra.mxu0 0.0
    %139 = vmatprep.subr.mxu0 0.0
    %140 = vmatpush1.msra.mxu0 0.0
    %141 = vmatprep.subr.mxu0 0.0
    %142 = vmatpush1.msra.mxu0 0.0
    %143 = vmatprep.subr.mxu0 0.0
    %144 = vmatpush1.msra.mxu0 0.0
    %145 = vmatprep.subr.mxu0 0.0
    %146 = vmatpush1.msra.mxu0 0.0
    %147 = vmatprep.subr.mxu0 0.0
    %148 = vmatpush1.msra.mxu0 0.0
    %149 = vmatprep.subr.mxu0 0.0
    %150 = vmatpush1.msra.mxu0 0.0
    %151 = vmatprep.subr.mxu0 0.0
    %152 = vmatpush1.msra.mxu0 0.0
    %153 = vmatprep.subr.mxu0 0.0
    %154 = vmatpush1.msra.mxu0 0.0
    %155 = vmatprep.subr.mxu0 0.0
    %156 = vmatpush1.msra.mxu0 0.0
    %157 = vmatprep.mubr.f32.mxu0 0.0
    %158 = vmatmul.mubr.f32.gmra.mrb[0].mxu0 %v68
    %v159 = vpop.f32.mrb[0].mxu0
    %v160 = vadd.f32 %v91, %v159
    %v161 = vpop.f32.mrb[0].mxu0
    %162 = vmatprep.mubr.f32.mxu0 0.0
    %163 = vmatmul.mubr.f32.gmra.mrb[0].mxu0 %v69
    %v164 = vpop.f32.mrb[0].mxu0
    %v165 = vadd.f32 %v91, %v164
    %v166 = vpop.f32.mrb[0].mxu0
    %167 = vdwg.mxu0
    %v168 = vmax.f32 %v160, 0.0
    %v169 = vmax.f32 %v165, 0.0
    %v170 = vld [vmem:[#allocation2] sm:$0xff]
    %v171 = vld [vmem:[#allocation2 + $0x8] sm:$0xff]
    %v172 = vld [vmem:[#allocation8] sm:$0xff]
    %v173 = vld [vmem:[#allocation8 + $0x8] sm:$0xff]
    %v174 = vld [vmem:[#allocation8 + $0x10] sm:$0xff]
    %v175 = vld [vmem:[#allocation8 + $0x18] sm:$0xff]
    %v176 = vld [vmem:[#allocation8 + $0x20] sm:$0xff]
    %v177 = vld [vmem:[#allocation8 + $0x28] sm:$0xff]
    %v178 = vld [vmem:[#allocation8 + $0x30] sm:$0xff]
    %v179 = vld [vmem:[#allocation8 + $0x38] sm:$0xff]
    %v180 = vld [vmem:[#allocation8 + $0x40] sm:$0xff]
    %v181 = vld [vmem:[#allocation8 + $0x48] sm:$0xff]
    %v182 = vld [vmem:[#allocation8 + $0x50] sm:$0xff]
    %v183 = vld [vmem:[#allocation8 + $0x58] sm:$0xff]
    %v184 = vld [vmem:[#allocation8 + $0x60] sm:$0xff]
    %v185 = vld [vmem:[#allocation8 + $0x68] sm:$0xff]
    %v186 = vld [vmem:[#allocation8 + $0x70] sm:$0xff]
    %v187 = vld [vmem:[#allocation8 + $0x78] sm:$0xff]
    %188 = vmatprep.subr.mxu0 0.0
    %189 = vmatpush1.msra.mxu0 %v172
    %190 = vmatprep.subr.mxu0 0.0
    %191 = vmatpush1.msra.mxu0 %v173
    %192 = vmatprep.subr.mxu0 0.0
    %193 = vmatpush1.msra.mxu0 %v174
    %194 = vmatprep.subr.mxu0 0.0
    %195 = vmatpush1.msra.mxu0 %v175
    %196 = vmatprep.subr.mxu0 0.0
    %197 = vmatpush1.msra.mxu0 %v176
    %198 = vmatprep.subr.mxu0 0.0
    %199 = vmatpush1.msra.mxu0 %v177
    %200 = vmatprep.subr.mxu0 0.0
    %201 = vmatpush1.msra.mxu0 %v178
    %202 = vmatprep.subr.mxu0 0.0
    %203 = vmatpush1.msra.mxu0 %v179
    %204 = vmatprep.subr.mxu0 0.0
    %205 = vmatpush1.msra.mxu0 %v180
    %206 = vmatprep.subr.mxu0 0.0
    %207 = vmatpush1.msra.mxu0 %v181
    %208 = vmatprep.subr.mxu0 0.0
    %209 = vmatpush1.msra.mxu0 %v182
    %210 = vmatprep.subr.mxu0 0.0
    %211 = vmatpush1.msra.mxu0 %v183
    %212 = vmatprep.subr.mxu0 0.0
    %213 = vmatpush1.msra.mxu0 %v184
    %214 = vmatprep.subr.mxu0 0.0
    %215 = vmatpush1.msra.mxu0 %v185
    %216 = vmatprep.subr.mxu0 0.0
    %217 = vmatpush1.msra.mxu0 %v186
    %218 = vmatprep.subr.mxu0 0.0
    %219 = vmatpush1.msra.mxu0 %v187
    %220 = vmatprep.subr.mxu0 0.0
    %221 = vmatpush1.msra.mxu0 0.0
    %222 = vmatprep.subr.mxu0 0.0
    %223 = vmatpush1.msra.mxu0 0.0
    %224 = vmatprep.subr.mxu0 0.0
    %225 = vmatpush1.msra.mxu0 0.0
    %226 = vmatprep.subr.mxu0 0.0
    %227 = vmatpush1.msra.mxu0 0.0
    %228 = vmatprep.subr.mxu0 0.0
    %229 = vmatpush1.msra.mxu0 0.0
    %230 = vmatprep.subr.mxu0 0.0
    %231 = vmatpush1.msra.mxu0 0.0
    %232 = vmatprep.subr.mxu0 0.0
    %233 = vmatpush1.msra.mxu0 0.0
    %234 = vmatprep.subr.mxu0 0.0
    %235 = vmatpush1.msra.mxu0 0.0
    %236 = vmatprep.subr.mxu0 0.0
    %237 = vmatpush1.msra.mxu0 0.0
    %238 = vmatprep.subr.mxu0 0.0
    %239 = vmatpush1.msra.mxu0 0.0
    %240 = vmatprep.subr.mxu0 0.0
    %241 = vmatpush1.msra.mxu0 0.0
    %242 = vmatprep.subr.mxu0 0.0
    %243 = vmatpush1.msra.mxu0 0.0
    %244 = vmatprep.subr.mxu0 0.0
    %245 = vmatpush1.msra.mxu0 0.0
    %246 = vmatprep.subr.mxu0 0.0
    %247 = vmatpush1.msra.mxu0 0.0
    %248 = vmatprep.subr.mxu0 0.0
    %249 = vmatpush1.msra.mxu0 0.0
    %250 = vmatprep.subr.mxu0 0.0
    %251 = vmatpush1.msra.mxu0 0.0
    %252 = vmatprep.mubr.f32.mxu0 0.0
    %253 = vmatmul.mubr.f32.gmra.mrb[0].mxu0 %v168
    %v254 = vpop.f32.mrb[0].mxu0
    %v255 = vadd.f32 0.0, %v254
    %v256 = vpop.f32.mrb[0].mxu0
    %257 = vmatprep.mubr.f32.mxu0 0.0
    %258 = vmatmul.mubr.f32.gmra.mrb[0].mxu0 %v169
    %v259 = vpop.f32.mrb[0].mxu0
    %v260 = vadd.f32 0.0, %v259
    %v261 = vpop.f32.mrb[0].mxu0
    %262 = vdwg.mxu0
    %v263 = vadd.f32 %v170, %v255
    %v264 = vadd.f32 %v171, %v260
    %265 = vst [vmem:[#allocation2] sm:$0xff] %v263
    %266 = vst [vmem:[#allocation2 + $0x8] sm:$0xff] %v264
    // Predicated region
    $region38: #{tpu_custom_call.1} parent=1 // pred_check
      %p267 = pneg %p62
    $region39: #{tpu_custom_call.1} parent=1 // pred_check_branch
      %269 = sbr.rel (%p267) target = $region41
    $region40: #{tpu_custom_call.1} parent=1 // pred_region
      %v270 = vld [vmem:[%s4] sm:$0x1]
      %v271 = vld [vmem:[%s4 + $0x1] sm:$0x1]
      %v272 = vld [vmem:[%s4 + $0x2] sm:$0x1]
      %v273 = vld [vmem:[#allocation2] sm:$0xff]
      %v274 = vld [vmem:[#allocation2 + $0x8] sm:$0xff]
      %v275 = vlaneseq
      %v276 = vshrl.u32 %v275, 7
      %v277 = vsub.s32 0, %v276
      %v278 = vrot.slane %v270, %v277
      %v279 = vadd.f32 %v273, %v278
      %v280 = vadd.f32 %v274, %v278
      %v281 = vld [vmem:[#allocation3] sm:$0xff]
      %v282 = vld [vmem:[#allocation3 + $0x8] sm:$0xff]
      %v283 = vadd.f32 %v279, %v281
      %v284 = vadd.f32 %v280, %v282
      %285 = vadd.xlane.f32.xlu0 %v283
      %v286 = vpop.xlane.xlu0 %285
      %287 = vadd.xlane.f32.xlu0 %v284
      %v288 = vpop.xlane.xlu0 %287
      %v289 = vmul.f32 %v286, 0.03125
      %v290 = vmul.f32 %v288, 0.03125
      %v291 = vsub.f32 %v283, %v289
      %v292 = vsub.f32 %v284, %v290
      %v293 = vmul.f32 %v291, %v291
      %v294 = vmul.f32 %v292, %v292
      %295 = vadd.xlane.f32.xlu0 %v293
      %v296 = vpop.xlane.xlu0 %295
      %297 = vadd.xlane.f32.xlu0 %v294
      %v298 = vpop.xlane.xlu0 %297
      %v299 = vmul.f32 %v289, 96.0
      %v300 = vmul.f32 %v290, 96.0
      %v301 = vmul.f32 %v299, %v289
      %v302 = vmul.f32 %v300, %v290
      %v303 = vsub.f32 %v296, %v301
      %v304 = vsub.f32 %v298, %v302
      %v305 = vmul.f32 %v303, 0.03125
      %v306 = vmul.f32 %v304, 0.03125
      %v307 = vadd.f32 %v305, 1e-05
      %v308 = vadd.f32 %v306, 1e-05
      %v309 = vrsqrt.pop %v307
      %v310 = vrsqrt.pop %v308
      %v311 = vmul.f32 %v291, %v309
      %v312 = vmul.f32 %v292, %v310
      %v313 = vlaneseq
      %v314 = vshrl.u32 %v313, 7
      %v315 = vsub.s32 0, %v314
      %v316 = vrot.slane %v271, %v315
      %v317 = vmul.f32 %v311, %v316
      %v318 = vmul.f32 %v312, %v316
      %v319 = vlaneseq
      %v320 = vshrl.u32 %v319, 7
      %v321 = vsub.s32 0, %v320
      %v322 = vrot.slane %v272, %v321
      %v323 = vadd.f32 %v317, %v322
      %v324 = vadd.f32 %v318, %v322
      %325 = vst [vmem:[#allocation9] sm:$0xff] %v323
      %326 = vst [vmem:[#allocation9 + $0x8] sm:$0xff] %v324
    $region41: #{tpu_custom_call.1} parent=1 // pred_fallthru
      _
    // Predicated region
    $region42: #{tpu_custom_call.1} parent=1 // pred_check
      _
    $region43: #{tpu_custom_call.1} parent=1 // pred_check_branch
      %328 = sbr.rel (0) target = $region45
    $region44: #{tpu_custom_call.1} parent=1 // pred_region
      %s330 = ssub.s32 256, 256
      %331 = vsyncadd [#allocation5], %s330
      %s332 = sshll.u32 [#allocation9], 4
      %s333 = int_to_ptr.vmem [resolvable:$true] %s332
      %338 = dma.vmem_to_hbm [thread:$0]  %s333, 256, %s5, [#allocation5], 128, 128, 8
    $region45: #{tpu_custom_call.1} parent=1 // pred_fallthru
      _
    // Predicated region
    $region46: #{tpu_custom_call.1} parent=1 // pred_check
      _
    $region47: #{tpu_custom_call.1} parent=1 // pred_check_branch
      %340 = sbr.rel (0) target = $region49
    $region48: #{tpu_custom_call.1} parent=1 // pred_region
      %341 = dma.done [#allocation5], 256
    $region49: #{tpu_custom_call.1} parent=1 // pred_fallthru
      _
    %342 = vsyncpa [#allocation4], 1
    %343 = vsyncpa [#allocation7], 1
    %344 = vsyncpa [#allocation5], 1

</llo_original>
